<compile_context>
chip_gen: v6e
topology: v6e:2x2x1
jax: 0.10.0
libtpu: 0.0.40
codegen_flags: <defaults>
</compile_context>

<pallas_src>
import functools

import jax
import jax.numpy as jnp
from jax.experimental import pallas as pl
from jax.experimental.pallas import tpu as pltpu


def _cdiv(a, b):
    return -(-a // b)


def _round_up(a, m):
    return _cdiv(a, m) * m


def _sublane_mult(itemsize):
    # 8 rows per vreg sublane group for f32, 16 for bf16, 32 for int8/fp8.
    return max(8, 32 // max(int(itemsize), 1))


def _vmem_limit_bytes():
    """Generation-aware VMEM budget (v5e/v6e: 128 MiB phys, v7x: 64 MiB)."""
    try:
        cap = int(pltpu.get_tpu_info().vmem_capacity_bytes)
    except Exception:
        cap = 64 * 1024 * 1024
    return max(32 * 1024 * 1024, min(cap // 2, 96 * 1024 * 1024))


def _pick_divisor(n, target, mult):
    """Largest t <= target with t % mult == 0 and n % t == 0, else None."""
    if n <= target:
        return n
    t = (min(target, n) // mult) * mult
    while t >= mult:
        if n % t == 0:
            return t
        t -= mult
    return None


# ---------------------------------------------------------------------------
# Fused small-input path: everything resident in VMEM, single launch.
# ---------------------------------------------------------------------------
def _fused_kernel(x_ref, proto_ref, o_ref, *, alpha, inv_hw):
    # x_ref: (B, C, HW), proto_ref: (P, C), o_ref: (B, C, HW) -- VMEM resident.
    x = x_ref[...].astype(jnp.float32)
    protos = proto_ref[...]
    feat = jnp.sum(x, axis=2) * inv_hw                               # (B, C)

    # Direct squared-difference distances on the VPU (tiny P*C here).
    # TODO(synk): for large P*C switch to the MXU (||f||^2+||p||^2-2 f.p^T and
    # jnp.dot(one_hot, protos)); this path is only taken for small inputs.
    diff = feat[:, None, :] - protos[None, :, :]                     # (B, P, C)
    d2 = jnp.sum(diff * diff, axis=-1)                               # (B, P)

    B, P = d2.shape
    min_d = jnp.min(d2, axis=1, keepdims=True)                       # (B, 1)
    iota_p = jax.lax.broadcasted_iota(jnp.int32, (B, P), 1)
    # First-occurrence argmin without dynamic gather.
    idx = jnp.min(jnp.where(d2 <= min_d, iota_p, P), axis=1, keepdims=True)
    one_hot = (iota_p == idx).astype(jnp.float32)                    # (B, P)
    nearest = jnp.sum(one_hot[:, :, None] * protos[None, :, :], axis=1)  # (B, C)

    delta = alpha * (nearest - feat)                                 # (B, C)
    o_ref[...] = (x + delta[:, :, None]).astype(o_ref.dtype)


def _fused_forward(x3, protos, alpha, vmem_limit):
    B, C, HW = x3.shape
    P, _ = protos.shape
    kernel = functools.partial(_fused_kernel, alpha=alpha, inv_hw=1.0 / HW)
    return pl.pallas_call(
        kernel,
        out_shape=jax.ShapeDtypeStruct((B, C, HW), x3.dtype),
        grid_spec=pltpu.PrefetchScalarGridSpec(
            num_scalar_prefetch=0,
            grid=(1,),
            in_specs=[
                pl.BlockSpec((B, C, HW), lambda i: (0, 0, 0)),
                pl.BlockSpec((P, C), lambda i: (0, 0)),
            ],
            out_specs=pl.BlockSpec((B, C, HW), lambda i: (0, 0, 0)),
        ),
        compiler_params=pltpu.CompilerParams(
            dimension_semantics=("arbitrary",),
            vmem_limit_bytes=vmem_limit,
        ),
    )(x3, protos)


# ---------------------------------------------------------------------------
# Pass 1 (streaming): global-average-pool over the packed (B*C, HW) view.
# ---------------------------------------------------------------------------
def _feat_kernel(x_ref, feat_ref, acc_ref, *, inv_hw, hw_total, tile_hw, need_mask):
    h = pl.program_id(1)

    @pl.when(h == 0)
    def _():
        acc_ref[...] = jnp.zeros_like(acc_ref)

    # Element-wise accumulation: 1 VPU add per vreg, no XLU work in the stream.
    xb = x_ref[...].astype(jnp.float32)                   # (tile_r, tile_hw)
    if need_mask:
        lane = jax.lax.broadcasted_iota(jnp.int32, xb.shape, 1) + h * tile_hw
        xb = jnp.where(lane < hw_total, xb, 0.0)
    acc_ref[...] += xb

    @pl.when(h == pl.num_programs(1) - 1)
    def _():
        # Single cross-lane reduce at the reduction boundary.
        feat_ref[...] = jnp.sum(acc_ref[...], axis=1, keepdims=True) * inv_hw


def _pooled_features(x2, vmem_limit):
    R, HW = x2.shape
    itemsize = jnp.dtype(x2.dtype).itemsize
    sub = _sublane_mult(itemsize)

    # Lane tiling: exact divisor when possible, else fixed lane-dense tile + mask.
    if HW <= 1024:
        tile_hw, need_mask = HW, False
    else:
        d = _pick_divisor(HW, 1024, 128)
        if d is not None:
            tile_hw, need_mask = d, False
        else:
            tile_hw, need_mask = 512, True
    n_h = _cdiv(HW, tile_hw)

    # Row tiling: keep double-buffered x blocks + f32 accumulator in budget.
    max_rows = max(sub, (vmem_limit // 6) // (tile_hw * 4))
    tile_r = min(R, 512, max_rows)
    if tile_r < R:
        tile_r = max(sub, (tile_r // sub) * sub)
    n_r = _cdiv(R, tile_r)

    kernel = functools.partial(
        _feat_kernel, inv_hw=1.0 / HW, hw_total=HW, tile_hw=tile_hw,
        need_mask=need_mask)
    return pl.pallas_call(
        kernel,
        out_shape=jax.ShapeDtypeStruct((R, 1), jnp.float32),
        grid_spec=pltpu.PrefetchScalarGridSpec(
            num_scalar_prefetch=0,
            grid=(n_r, n_h),
            in_specs=[pl.BlockSpec((tile_r, tile_hw), lambda r, h: (r, h))],
            out_specs=pl.BlockSpec((tile_r, 1), lambda r, h: (r, 0)),
            scratch_shapes=[pltpu.VMEM((tile_r, tile_hw), jnp.float32)],
        ),
        compiler_params=pltpu.CompilerParams(
            dimension_semantics=("parallel", "arbitrary"),  # megacore over rows
            vmem_limit_bytes=vmem_limit,
        ),
    )(x2)


# ---------------------------------------------------------------------------
# Pass 2 (streaming): out[r, :] = x[r, :] + delta[r]
# ---------------------------------------------------------------------------
def _apply_kernel(x_ref, d_ref, o_ref):
    # x_ref: (tile_r, tile_hw), d_ref: (tile_r, 1)  -> lane broadcast add.
    o_ref[...] = (x_ref[...].astype(jnp.float32) + d_ref[...]).astype(o_ref.dtype)


def _apply_delta(x2, delta2, vmem_limit):
    R, HW = x2.shape
    itemsize = jnp.dtype(x2.dtype).itemsize
    sub = _sublane_mult(itemsize)

    if HW <= 2048:
        tile_hw = HW
    else:
        tile_hw = _pick_divisor(HW, 2048, 128) or 1024   # ragged edge handled by grid
    n_h = _cdiv(HW, tile_hw)

    max_rows = max(sub, (vmem_limit // 6) // (tile_hw * max(itemsize, 4)))
    tile_r = min(R, 1024, max_rows)
    if tile_r < R:
        tile_r = max(sub, (tile_r // sub) * sub)
    n_r = _cdiv(R, tile_r)

    return pl.pallas_call(
        _apply_kernel,
        out_shape=jax.ShapeDtypeStruct((R, HW), x2.dtype),
        grid_spec=pltpu.PrefetchScalarGridSpec(
            num_scalar_prefetch=0,
            grid=(n_r, n_h),
            in_specs=[
                pl.BlockSpec((tile_r, tile_hw), lambda r, h: (r, h)),
                pl.BlockSpec((tile_r, 1), lambda r, h: (r, 0)),
            ],
            out_specs=pl.BlockSpec((tile_r, tile_hw), lambda r, h: (r, h)),
        ),
        # NOTE: no input_output_aliases -- the un-donated jit input forced a
        # hidden defensive copy of x before the aliased call (extra read+write).
        compiler_params=pltpu.CompilerParams(
            dimension_semantics=("parallel", "parallel"),
            vmem_limit_bytes=vmem_limit,
        ),
    )(x2, delta2)


# ---------------------------------------------------------------------------
# Public wrapper
# ---------------------------------------------------------------------------
def _nearest_delta(feat, protos, alpha):
    """Tiny (B, P, C) nearest-prototype math; negligible next to the streams."""
    d2 = jnp.sum((feat[:, None, :] - protos[None, :, :]) ** 2, axis=-1)  # (B, P)
    idx = jnp.argmin(d2, axis=1)                                         # (B,)
    nearest = protos[idx]                                                # (B, C)
    return alpha * (nearest - feat)


@functools.partial(jax.jit, static_argnames=("alpha", "force_two_pass"))
def prototype_alignment(x, prototypes, alpha=0.5, force_two_pass=False):
    """x: (B, C, H, W), prototypes: (P, C) -> (B, C, H, W)."""
    B, C, H, W = x.shape
    P, _ = prototypes.shape
    HW = H * W
    protos = prototypes.astype(jnp.float32)
    vmem_limit = _vmem_limit_bytes()

    itemsize = jnp.dtype(x.dtype).itemsize
    sub = _sublane_mult(itemsize)
    padded_x = B * _round_up(C, sub) * _round_up(HW, 128) * itemsize
    fused_ok = (2 * padded_x + B * P * _round_up(C, 128) * 4) <= 8 * 1024 * 1024

    if fused_ok and not force_two_pass:
        out3 = _fused_forward(x.reshape(B, C, HW), protos, float(alpha), vmem_limit)
        return out3.reshape(B, C, H, W)

    # Two-pass streaming path over the fully packed 2-D view.
    x2 = x.reshape(B * C, HW)
    feat = _pooled_features(x2, vmem_limit).reshape(B, C)          # (B, C) f32
    delta = _nearest_delta(feat, protos, float(alpha))             # (B, C) f32
    out2 = _apply_delta(x2, delta.reshape(B * C, 1), vmem_limit)
    return out2.reshape(B, C, H, W)


def prototype_alignment_ref(x, prototypes, alpha=0.5):
    """Pure-JAX reference matching the PyTorch forward."""
    B, C, H, W = x.shape
    feat = x.reshape(B, C, -1).mean(axis=2)                               # (B, C)
    dists = jnp.sqrt(jnp.maximum(
        jnp.sum((feat[:, None, :] - prototypes[None, :, :]) ** 2, axis=-1), 0.0))
    idx = jnp.argmin(dists, axis=1)                                       # (B,)
    nearest = prototypes[idx]                                             # (B, C)
    delta = alpha * (nearest - feat)                                      # (B, C)
    return x + delta[:, :, None, None]


if __name__ == "__main__":
    key = jax.random.PRNGKey(0)
    kx, kp = jax.random.split(key)

    B, C, H, W = 2, 4, 16, 16
    P = 10
    alpha = 0.5

    x = jax.random.normal(kx, (B, C, H, W), dtype=jnp.float32)
    # Deterministic in-script "randn" init of the prototype parameter.
    prototypes = jax.random.normal(kp, (P, C), dtype=jnp.float32)

    ref = prototype_alignment_ref(x, prototypes, alpha=alpha)

    # Fused (small-input) path.
    out = jax.block_until_ready(prototype_alignment(x, prototypes, alpha=alpha))
    assert out.shape == (B, C, H, W)
    assert jnp.allclose(out, ref, atol=1e-5, rtol=1e-5), "fused path mismatch"

    # Streaming two-pass path (same shapes, forced for coverage).
    out2 = jax.block_until_ready(
        prototype_alignment(x, prototypes, alpha=alpha, force_two_pass=True))
    assert jnp.allclose(out2, ref, atol=1e-5, rtol=1e-5), "two-pass path mismatch"

    print("KERNEL_OK")
</pallas_src>

<mosaic_0001>
module attributes {stable_mosaic.version = 11 : i64} {
  func.func @_fused_kernel(%arg0: i32, %arg1: memref<2x4x256xf32, #tpu.memory_space<vmem>>, %arg2: memref<10x4xf32, #tpu.memory_space<vmem>>, %arg3: memref<2x4x256xf32, #tpu.memory_space<vmem>>) attributes {dimension_semantics = [#tpu.dimension_semantics<arbitrary>], iteration_bounds = array<i64: 1>, scalar_prefetch = 0 : i64, scratch_operands = 0 : i64, tpu.core_type = #tpu.core_type<tc>, window_params = [{pipeline_mode = #tpu.pipeline_mode<synchronous>, transform_indices = @transform_0, window_bounds = array<i64: 2, 4, 256>}, {pipeline_mode = #tpu.pipeline_mode<synchronous>, transform_indices = @transform_1, window_bounds = array<i64: 10, 4>}, {pipeline_mode = #tpu.pipeline_mode<synchronous>, transform_indices = @transform_2, window_bounds = array<i64: 2, 4, 256>}]} {
    %c0 = arith.constant 0 : index
    %c0_0 = arith.constant 0 : index
    %c0_1 = arith.constant 0 : index
    %0 = vector.load %arg1[%c0, %c0_0, %c0_1] : memref<2x4x256xf32, #tpu.memory_space<vmem>>, vector<2x4x256xf32>
    %c0_2 = arith.constant 0 : index
    %c0_3 = arith.constant 0 : index
    %1 = vector.load %arg2[%c0_2, %c0_3] : memref<10x4xf32, #tpu.memory_space<vmem>>, vector<10x4xf32>
    %cst = arith.constant dense<0.000000e+00> : vector<2x4xf32>
    %2 = vector.multi_reduction <add>, %0, %cst [2] : vector<2x4x256xf32> to vector<2x4xf32>
    %cst_4 = arith.constant 3.906250e-03 : f32
    %3 = vector.broadcast %cst_4 : f32 to vector<2x4xf32>
    %4 = arith.mulf %2, %3 : vector<2x4xf32>
    %5 = vector.shape_cast %4 : vector<2x4xf32> to vector<2x1x4xf32>
    %6 = vector.shape_cast %1 : vector<10x4xf32> to vector<1x10x4xf32>
    %7 = vector.broadcast %5 : vector<2x1x4xf32> to vector<2x10x4xf32>
    %8 = vector.broadcast %6 : vector<1x10x4xf32> to vector<2x10x4xf32>
    %9 = arith.subf %7, %8 : vector<2x10x4xf32>
    %10 = arith.mulf %9, %9 : vector<2x10x4xf32>
    %cst_5 = arith.constant dense<0.000000e+00> : vector<2x10xf32>
    %11 = vector.multi_reduction <add>, %10, %cst_5 [2] : vector<2x10x4xf32> to vector<2x10xf32>
    %cst_6 = arith.constant dense<0x7F800000> : vector<2xf32>
    %12 = vector.multi_reduction <minimumf>, %11, %cst_6 [1] : vector<2x10xf32> to vector<2xf32>
    %13 = vector.shape_cast %12 : vector<2xf32> to vector<2x1xf32>
    %14 = tpu.iota {dimensions = array<i32: 1>} : vector<2x10xi32>
    %15 = vector.broadcast %13 : vector<2x1xf32> to vector<2x10xf32>
    %16 = arith.cmpf ole, %11, %15 : vector<2x10xf32>
    %c10_i32 = arith.constant 10 : i32
    %17 = vector.broadcast %c10_i32 : i32 to vector<2x10xi32>
    %18 = arith.select %16, %14, %17 : vector<2x10xi1>, vector<2x10xi32>
    %cst_7 = arith.constant dense<2147483647> : vector<2xi32>
    %19 = vector.multi_reduction <minsi>, %18, %cst_7 [1] : vector<2x10xi32> to vector<2xi32>
    %20 = vector.shape_cast %19 : vector<2xi32> to vector<2x1xi32>
    %21 = vector.broadcast %20 : vector<2x1xi32> to vector<2x10xi32>
    %22 = arith.cmpi eq, %14, %21 : vector<2x10xi32>
    %23 = arith.extui %22 : vector<2x10xi1> to vector<2x10xi32>
    %24 = arith.sitofp %23 : vector<2x10xi32> to vector<2x10xf32>
    %25 = vector.shape_cast %24 : vector<2x10xf32> to vector<2x10x1xf32>
    %26 = vector.shape_cast %1 : vector<10x4xf32> to vector<1x10x4xf32>
    %27 = vector.broadcast %25 : vector<2x10x1xf32> to vector<2x10x4xf32>
    %28 = vector.broadcast %26 : vector<1x10x4xf32> to vector<2x10x4xf32>
    %29 = arith.mulf %27, %28 : vector<2x10x4xf32>
    %cst_8 = arith.constant dense<0.000000e+00> : vector<2x4xf32>
    %30 = vector.multi_reduction <add>, %29, %cst_8 [1] : vector<2x10x4xf32> to vector<2x4xf32>
    %31 = arith.subf %30, %4 : vector<2x4xf32>
    %cst_9 = arith.constant 5.000000e-01 : f32
    %32 = vector.broadcast %cst_9 : f32 to vector<2x4xf32>
    %33 = arith.mulf %32, %31 : vector<2x4xf32>
    %34 = vector.shape_cast %33 : vector<2x4xf32> to vector<2x4x1xf32>
    %35 = vector.broadcast %34 : vector<2x4x1xf32> to vector<2x4x256xf32>
    %36 = arith.addf %0, %35 : vector<2x4x256xf32>
    %c0_10 = arith.constant 0 : index
    %c0_11 = arith.constant 0 : index
    %c0_12 = arith.constant 0 : index
    %37 = vector.load %arg3[%c0_10, %c0_11, %c0_12] : memref<2x4x256xf32, #tpu.memory_space<vmem>>, vector<2x4x256xf32>
    tpu.vector_store %arg3[%c0_10, %c0_11, %c0_12], %36 {strides = array<i32>} : memref<2x4x256xf32, #tpu.memory_space<vmem>>, vector<2x4x256xf32>,
    return
  }
  func.func @transform_0(%arg0: i32) -> (i32, i32, i32) {
    %c0_i32 = arith.constant 0 : i32
    %c0_i32_0 = arith.constant 0 : i32
    %c0_i32_1 = arith.constant 0 : i32
    %c0_i32_2 = arith.constant 0 : i32
    return %c0_i32, %c0_i32_0, %c0_i32_1 : i32, i32, i32
  }
  func.func @transform_1(%arg0: i32) -> (i32, i32) {
    %c0_i32 = arith.constant 0 : i32
    %c0_i32_0 = arith.constant 0 : i32
    %c0_i32_1 = arith.constant 0 : i32
    return %c0_i32, %c0_i32_0 : i32, i32
  }
  func.func @transform_2(%arg0: i32) -> (i32, i32, i32) {
    %c0_i32 = arith.constant 0 : i32
    %c0_i32_0 = arith.constant 0 : i32
    %c0_i32_1 = arith.constant 0 : i32
    %c0_i32_2 = arith.constant 0 : i32
    return %c0_i32, %c0_i32_0, %c0_i32_1 : i32, i32, i32
  }
}

</mosaic_0001>

<llo_original>
// kernel: prototype_alignment.1
$region0: #{prototype_alignment.1}
  #allocation0 [shape = 'u32[]', space=smem, size = 0x4, offset = 0x4, fixed_abs, tag = 'smem constant byte address 0x4 - core index']
  #allocation1 [shape = 'u32[144,128]{1,0:T(1,128)}', space=vmem, size = 0x12000, scoped, tag = 'internal scratch']
  %s0 = inlined_call_operand.vmem [shape: f32[2,4,256], index: 0, kind: input, shape index: {}]
  %s1 = inlined_call_operand.vmem [shape: f32[10,4], index: 1, kind: input, shape index: {}]
  %s2 = inlined_call_operand.vmem [shape: f32[2,4,256], index: 2, kind: output, shape index: {}]
  %s3 = sld [smem:[#allocation0]]
  $region18: #{prototype_alignment.1} parent=0
    _
  %s5 = ssub.s32 1, %s3
  %s6 = scalar_select 0, %s5, %s3
  // Predicated region
  $region2: #{prototype_alignment.1} parent=0 // pred_check
    _
  $region3: #{prototype_alignment.1} parent=0 // pred_check_branch
    %8 = sbr.rel (0) target = $region5
  $region4: #{prototype_alignment.1} parent=0 // pred_region
    _
  $region5: #{prototype_alignment.1} parent=0 // pred_fallthru
    _
  // Predicated region
  $region6: #{prototype_alignment.1} parent=0 // pred_check
    _
  $region7: #{prototype_alignment.1} parent=0 // pred_check_branch
    %10 = sbr.rel (0) target = $region9
  $region8: #{prototype_alignment.1} parent=0 // pred_region
    _
  $region9: #{prototype_alignment.1} parent=0 // pred_fallthru
    _
  %v11 = vld [vmem:[%s0] sm:$0xff]
  %v12 = vld [vmem:[%s0 + $0x8] sm:$0xff]
  %v13 = vld [vmem:[%s1] sm:$0xff]
  %v14 = vld [vmem:[%s1 + $0x8] sm:$0x3]
  %v17 = vcombine.high %v11, %v11
  %v18 = vcombine.high %v12, %v12
  %vm21 = vcmask 1043456
  %v22 = vsel %vm21, %v11, 0.0
  %v23 = vsel %vm21, %v17, 0.0
  %v24 = vadd.f32 %v22, %v23
  %25 = vadd.xlane.f32.xlu0 %v24
  %v26 = vpop.xlane.xlu0 %25
  %v27 = vsel %vm21, %v12, 0.0
  %v28 = vsel %vm21, %v18, 0.0
  %v29 = vadd.f32 %v27, %v28
  %30 = vadd.xlane.f32.xlu0 %v29
  %v31 = vpop.xlane.xlu0 %30
  %v32 = vmul.f32 %v26, 0.00390625
  %v33 = vmul.f32 %v31, 0.00390625
  %v36 = vlaneseq
  %v37 = vshrl.u32 %v36, 7
  %v38 = vsub.s32 0, %v37
  %v39 = vrot.slane %v13, %v38
  %41 = vbcast.lane.b32.xlu0 %v39, 256
  %v42 = vpop.permute.xlu0 %41
  %v43 = vlaneseq
  %v44 = vshrl.u32 %v43, 7
  %v45 = vsub.s32 1, %v44
  %v46 = vrot.slane %v13, %v45
  %48 = vbcast.lane.b32.xlu0 %v46, 256
  %v49 = vpop.permute.xlu0 %48
  %v50 = vlaneseq
  %v51 = vshrl.u32 %v50, 7
  %v52 = vsub.s32 2, %v51
  %v53 = vrot.slane %v13, %v52
  %55 = vbcast.lane.b32.xlu0 %v53, 256
  %v56 = vpop.permute.xlu0 %55
  %v57 = vlaneseq
  %v58 = vshrl.u32 %v57, 7
  %v59 = vsub.s32 3, %v58
  %v60 = vrot.slane %v13, %v59
  %62 = vbcast.lane.b32.xlu0 %v60, 256
  %v63 = vpop.permute.xlu0 %62
  %v64 = vlaneseq
  %v65 = vshrl.u32 %v64, 7
  %v66 = vsub.s32 4, %v65
  %v67 = vrot.slane %v13, %v66
  %69 = vbcast.lane.b32.xlu0 %v67, 256
  %v70 = vpop.permute.xlu0 %69
  %v71 = vlaneseq
  %v72 = vshrl.u32 %v71, 7
  %v73 = vsub.s32 5, %v72
  %v74 = vrot.slane %v13, %v73
  %76 = vbcast.lane.b32.xlu0 %v74, 256
  %v77 = vpop.permute.xlu0 %76
  %v78 = vlaneseq
  %v79 = vshrl.u32 %v78, 7
  %v80 = vsub.s32 6, %v79
  %v81 = vrot.slane %v13, %v80
  %83 = vbcast.lane.b32.xlu0 %v81, 256
  %v84 = vpop.permute.xlu0 %83
  %v85 = vlaneseq
  %v86 = vshrl.u32 %v85, 7
  %v87 = vsub.s32 7, %v86
  %v88 = vrot.slane %v13, %v87
  %90 = vbcast.lane.b32.xlu0 %v88, 256
  %v91 = vpop.permute.xlu0 %90
  %v92 = vlaneseq
  %v93 = vshrl.u32 %v92, 7
  %v94 = vsub.s32 0, %v93
  %v95 = vrot.slane %v14, %v94
  %97 = vbcast.lane.b32.xlu0 %v95, 256
  %v98 = vpop.permute.xlu0 %97
  %v99 = vlaneseq
  %v100 = vshrl.u32 %v99, 7
  %v101 = vsub.s32 1, %v100
  %v102 = vrot.slane %v14, %v101
  %104 = vbcast.lane.b32.xlu0 %v102, 256
  %v105 = vpop.permute.xlu0 %104
  %v116 = vsub.f32 %v32, %v42
  %v117 = vsub.f32 %v32, %v49
  %v118 = vsub.f32 %v32, %v56
  %v119 = vsub.f32 %v32, %v63
  %v120 = vsub.f32 %v32, %v70
  %v121 = vsub.f32 %v32, %v77
  %v122 = vsub.f32 %v32, %v84
  %v123 = vsub.f32 %v32, %v91
  %v124 = vsub.f32 %v32, %v98
  %v125 = vsub.f32 %v32, %v105
  %v126 = vsub.f32 %v33, %v42
  %v127 = vsub.f32 %v33, %v49
  %v128 = vsub.f32 %v33, %v56
  %v129 = vsub.f32 %v33, %v63
  %v130 = vsub.f32 %v33, %v70
  %v131 = vsub.f32 %v33, %v77
  %v132 = vsub.f32 %v33, %v84
  %v133 = vsub.f32 %v33, %v91
  %v134 = vsub.f32 %v33, %v98
  %v135 = vsub.f32 %v33, %v105
  %v136 = vmul.f32 %v116, %v116
  %v137 = vmul.f32 %v117, %v117
  %v138 = vmul.f32 %v118, %v118
  %v139 = vmul.f32 %v119, %v119
  %v140 = vmul.f32 %v120, %v120
  %v141 = vmul.f32 %v121, %v121
  %v142 = vmul.f32 %v122, %v122
  %v143 = vmul.f32 %v123, %v123
  %v144 = vmul.f32 %v124, %v124
  %v145 = vmul.f32 %v125, %v125
  %v146 = vmul.f32 %v126, %v126
  %v147 = vmul.f32 %v127, %v127
  %v148 = vmul.f32 %v128, %v128
  %v149 = vmul.f32 %v129, %v129
  %v150 = vmul.f32 %v130, %v130
  %v151 = vmul.f32 %v131, %v131
  %v152 = vmul.f32 %v132, %v132
  %v153 = vmul.f32 %v133, %v133
  %v154 = vmul.f32 %v134, %v134
  %v155 = vmul.f32 %v135, %v135
  %176 = vset.pattern.permute.xlu0 0
  %177 = vperm.xlu0 %176, %v136
  %v178 = vpop.permute.xlu0 %177
  %179 = vset.pattern.permute.xlu0 0
  %180 = vperm.xlu0 %179, %v137
  %v181 = vpop.permute.xlu0 %180
  %182 = vset.pattern.permute.xlu0 0
  %183 = vperm.xlu0 %182, %v138
  %v184 = vpop.permute.xlu0 %183
  %185 = vset.pattern.permute.xlu0 0
  %186 = vperm.xlu0 %185, %v139
  %v187 = vpop.permute.xlu0 %186
  %188 = vset.pattern.permute.xlu0 0
  %189 = vperm.xlu0 %188, %v140
  %v190 = vpop.permute.xlu0 %189
  %191 = vset.pattern.permute.xlu0 0
  %192 = vperm.xlu0 %191, %v141
  %v193 = vpop.permute.xlu0 %192
  %194 = vset.pattern.permute.xlu0 0
  %195 = vperm.xlu0 %194, %v142
  %v196 = vpop.permute.xlu0 %195
  %197 = vset.pattern.permute.xlu0 0
  %198 = vperm.xlu0 %197, %v143
  %v199 = vpop.permute.xlu0 %198
  %200 = vset.pattern.permute.xlu0 0
  %201 = vperm.xlu0 %200, %v144
  %v202 = vpop.permute.xlu0 %201
  %203 = vset.pattern.permute.xlu0 0
  %204 = vperm.xlu0 %203, %v145
  %v205 = vpop.permute.xlu0 %204
  %206 = vset.pattern.permute.xlu0 0
  %207 = vperm.xlu0 %206, %v146
  %v208 = vpop.permute.xlu0 %207
  %209 = vset.pattern.permute.xlu0 0
  %210 = vperm.xlu0 %209, %v147
  %v211 = vpop.permute.xlu0 %210
  %212 = vset.pattern.permute.xlu0 0
  %213 = vperm.xlu0 %212, %v148
  %v214 = vpop.permute.xlu0 %213
  %215 = vset.pattern.permute.xlu0 0
  %216 = vperm.xlu0 %215, %v149
  %v217 = vpop.permute.xlu0 %216
  %218 = vset.pattern.permute.xlu0 0
  %219 = vperm.xlu0 %218, %v150
  %v220 = vpop.permute.xlu0 %219
  %221 = vset.pattern.permute.xlu0 0
  %222 = vperm.xlu0 %221, %v151
  %v223 = vpop.permute.xlu0 %222
  %224 = vset.pattern.permute.xlu0 0
  %225 = vperm.xlu0 %224, %v152
  %v226 = vpop.permute.xlu0 %225
  %227 = vset.pattern.permute.xlu0 0
  %228 = vperm.xlu0 %227, %v153
  %v229 = vpop.permute.xlu0 %228
  %230 = vset.pattern.permute.xlu0 0
  %231 = vperm.xlu0 %230, %v154
  %v232 = vpop.permute.xlu0 %231
  %233 = vset.pattern.permute.xlu0 0
  %234 = vperm.xlu0 %233, %v155
  %v235 = vpop.permute.xlu0 %234
  %v236 = vlaneseq
  %v237 = vand.u32 %v236, 127
  %v238 = vlaneseq
  %v239 = vshrl.u32 %v238, 7
  %v240 = vsub.s32 %v237, %v239
  %v241 = vrot.slane %v178, %v240
  %v242 = vlaneseq
  %v243 = vshrl.u32 %v242, 7
  %v244 = vsub.s32 %v237, %v243
  %v245 = vrot.slane %v181, %v244
  %v246 = vlaneseq
  %v247 = vshrl.u32 %v246, 7
  %v248 = vsub.s32 %v237, %v247
  %v249 = vrot.slane %v184, %v248
  %v250 = vlaneseq
  %v251 = vshrl.u32 %v250, 7
  %v252 = vsub.s32 %v237, %v251
  %v253 = vrot.slane %v187, %v252
  %v254 = vlaneseq
  %v255 = vshrl.u32 %v254, 7
  %v256 = vsub.s32 %v237, %v255
  %v257 = vrot.slane %v190, %v256
  %v258 = vlaneseq
  %v259 = vshrl.u32 %v258, 7
  %v260 = vsub.s32 %v237, %v259
  %v261 = vrot.slane %v193, %v260
  %v262 = vlaneseq
  %v263 = vshrl.u32 %v262, 7
  %v264 = vsub.s32 %v237, %v263
  %v265 = vrot.slane %v196, %v264
  %v266 = vlaneseq
  %v267 = vshrl.u32 %v266, 7
  %v268 = vsub.s32 %v237, %v267
  %v269 = vrot.slane %v199, %v268
  %v270 = vlaneseq
  %v271 = vshrl.u32 %v270, 7
  %v272 = vsub.s32 %v237, %v271
  %v273 = vrot.slane %v202, %v272
  %v274 = vlaneseq
  %v275 = vshrl.u32 %v274, 7
  %v276 = vsub.s32 %v237, %v275
  %v277 = vrot.slane %v205, %v276
  %v278 = vlaneseq
  %v279 = vshrl.u32 %v278, 7
  %v280 = vsub.s32 %v237, %v279
  %v281 = vrot.slane %v208, %v280
  %v282 = vlaneseq
  %v283 = vshrl.u32 %v282, 7
  %v284 = vsub.s32 %v237, %v283
  %v285 = vrot.slane %v211, %v284
  %v286 = vlaneseq
  %v287 = vshrl.u32 %v286, 7
  %v288 = vsub.s32 %v237, %v287
  %v289 = vrot.slane %v214, %v288
  %v290 = vlaneseq
  %v291 = vshrl.u32 %v290, 7
  %v292 = vsub.s32 %v237, %v291
  %v293 = vrot.slane %v217, %v292
  %v294 = vlaneseq
  %v295 = vshrl.u32 %v294, 7
  %v296 = vsub.s32 %v237, %v295
  %v297 = vrot.slane %v220, %v296
  %v298 = vlaneseq
  %v299 = vshrl.u32 %v298, 7
  %v300 = vsub.s32 %v237, %v299
  %v301 = vrot.slane %v223, %v300
  %v302 = vlaneseq
  %v303 = vshrl.u32 %v302, 7
  %v304 = vsub.s32 %v237, %v303
  %v305 = vrot.slane %v226, %v304
  %v306 = vlaneseq
  %v307 = vshrl.u32 %v306, 7
  %v308 = vsub.s32 %v237, %v307
  %v309 = vrot.slane %v229, %v308
  %v310 = vlaneseq
  %v311 = vshrl.u32 %v310, 7
  %v312 = vsub.s32 %v237, %v311
  %v313 = vrot.slane %v232, %v312
  %v314 = vlaneseq
  %v315 = vshrl.u32 %v314, 7
  %v316 = vsub.s32 %v237, %v315
  %v317 = vrot.slane %v235, %v316
  %vm318 = vcmask 1041409
  %v319 = vsel %vm318, %v245, %v241
  %vm320 = vcmask 1042434
  %v321 = vsel %vm320, %v249, %v319
  %vm322 = vcmask 1043459
  %v323 = vsel %vm322, %v253, %v321
  %vm324 = vcmask 1044484
  %v325 = vsel %vm324, %v257, %v323
  %vm326 = vcmask 1045509
  %v327 = vsel %vm326, %v261, %v325
  %vm328 = vcmask 1046534
  %v329 = vsel %vm328, %v265, %v327
  %vm330 = vcmask 1047559
  %v331 = vsel %vm330, %v269, %v329
  %v332 = vsel %vm318, %v277, %v273
  %v333 = vsel %vm318, %v285, %v281
  %v334 = vsel %vm320, %v289, %v333
  %v335 = vsel %vm322, %v293, %v334
  %v336 = vsel %vm324, %v297, %v335
  %v337 = vsel %vm326, %v301, %v336
  %v338 = vsel %vm328, %v305, %v337
  %v339 = vsel %vm330, %v309, %v338
  %v340 = vsel %vm318, %v317, %v313
  %vm345 = vcmask 31744
  %v346 = vsel %vm345, %v331, 0.0
  %347 = vadd.xlane.f32.xlu0 %v346
  %v348 = vpop.xlane.xlu0 %347
  %vm349 = vcmask 25600
  %v350 = vsel %vm349, %v332, 0.0
  %351 = vadd.xlane.f32.xlu0 %v350
  %v352 = vpop.xlane.xlu0 %351
  %v353 = vsel %vm345, %v339, 0.0
  %354 = vadd.xlane.f32.xlu0 %v353
  %v355 = vpop.xlane.xlu0 %354
  %v356 = vsel %vm349, %v340, 0.0
  %357 = vadd.xlane.f32.xlu0 %v356
  %v358 = vpop.xlane.xlu0 %357
  %v363 = vlaneseq
  %v364 = vshrl.u32 %v363, 7
  %v365 = vsub.s32 %v237, %v364
  %v366 = vrot.slane %v348, %v365
  %v367 = vadd.s32 %v237, 4294967288
  %v368 = vlaneseq
  %v369 = vshrl.u32 %v368, 7
  %v370 = vsub.s32 %v367, %v369
  %v371 = vrot.slane %v352, %v370
  %vm372 = vcmask 130112
  %v373 = vsel %vm372, %v371, %v366
  %v374 = vlaneseq
  %v375 = vshrl.u32 %v374, 7
  %v376 = vsub.s32 %v237, %v375
  %v377 = vrot.slane %v355, %v376
  %v378 = vlaneseq
  %v379 = vshrl.u32 %v378, 7
  %v380 = vsub.s32 %v367, %v379
  %v381 = vrot.slane %v358, %v380
  %v382 = vsel %vm372, %v381, %v377
  %v383 = vsel %vm318, %v382, %v373
  %vm385 = vcmask 74752
  %v386 = vsel %vm385, %v383, inf
  %387 = vmin.xlane.f32.xlu0 %v386
  %v388 = vpop.xlane.xlu0 %387
  %v390 = vlaneseq
  %v391 = vshrl.u32 %v390, 7
  %v392 = vsub.s32 0, %v391
  %v393 = vrot.slane %v388, %v392
  %v394 = vlaneseq
  %v395 = vshrl.u32 %v394, 7
  %v396 = vsub.s32 1, %v395
  %v397 = vrot.slane %v388, %v396
  %vm400 = vcmp.le.f32.partialorder %v348, %v393
  %vm401 = vcmp.le.f32.partialorder %v352, %v393
  %vm402 = vcmp.le.f32.partialorder %v355, %v397
  %vm403 = vcmp.le.f32.partialorder %v358, %v397
  %405 = vbcast.lane.b32.xlu0 %v237, 256
  %v406 = vpop.permute.xlu0 %405
  %s408 = sor.u32 256, 8
  %409 = vbcast.lane.b32.xlu0 %v237, %s408
  %v410 = vpop.permute.xlu0 %409
  %v411 = vsel %vm400, %v406, 10
  %v412 = vsel %vm401, %v410, 10
  %v413 = vsel %vm402, %v406, 10
  %v414 = vsel %vm403, %v410, 10
  %415 = vset.pattern.permute.xlu0 0
  %416 = vperm.xlu0 %415, %v411
  %v417 = vpop.permute.xlu0 %416
  %418 = vset.pattern.permute.xlu0 0
  %419 = vperm.xlu0 %418, %v412
  %v420 = vpop.permute.xlu0 %419
  %421 = vset.pattern.permute.xlu0 0
  %422 = vperm.xlu0 %421, %v413
  %v423 = vpop.permute.xlu0 %422
  %424 = vset.pattern.permute.xlu0 0
  %425 = vperm.xlu0 %424, %v414
  %v426 = vpop.permute.xlu0 %425
  %v427 = vlaneseq
  %v428 = vshrl.u32 %v427, 7
  %v429 = vsub.s32 %v237, %v428
  %v430 = vrot.slane %v417, %v429
  %v431 = vlaneseq
  %v432 = vshrl.u32 %v431, 7
  %v433 = vsub.s32 %v367, %v432
  %v434 = vrot.slane %v420, %v433
  %v435 = vsel %vm372, %v434, %v430
  %v436 = vlaneseq
  %v437 = vshrl.u32 %v436, 7
  %v438 = vsub.s32 %v237, %v437
  %v439 = vrot.slane %v423, %v438
  %v440 = vlaneseq
  %v441 = vshrl.u32 %v440, 7
  %v442 = vsub.s32 %v367, %v441
  %v443 = vrot.slane %v426, %v442
  %v444 = vsel %vm372, %v443, %v439
  %v445 = vsel %vm318, %v444, %v435
  %v446 = vsel %vm385, %v445, 2147483647
  %v447 = vand.u32 %v446, 65535
  %v448 = vshra.s32 %v446, 16
  %v449 = vcvt.s32.f32 %v447
  %v450 = vcvt.s32.f32 %v448
  %451 = vmin.xlane.f32.xlu0 %v450
  %v452 = vpop.xlane.xlu0 %451
  %vm453 = vcmp.eq.f32.partialorder %v450, %v452
  %v454 = vsel %vm453, %v449, inf
  %455 = vmin.xlane.f32.xlu0 %v454
  %v456 = vpop.xlane.xlu0 %455
  %v457 = vcvt.f32.s32 %v456
  %v458 = vcvt.f32.s32 %v452
  %v459 = vshll.u32 %v458, 16
  %v460 = vadd.s32 %v459, %v457
  %vm461 = vcmp.eq.s32.totalorder %v237, %v460
  %v462 = vsel %vm461, 1, 0
  %v463 = vcvt.s32.f32 %v462
  %v464 = vlaneseq
  %v465 = vshrl.u32 %v464, 7
  %v466 = vsub.s32 0, %v465
  %v467 = vrot.slane %v463, %v466
  %469 = vbcast.lane.b32.xlu0 %v467, 256
  %v470 = vpop.permute.xlu0 %469
  %s472 = sor.u32 256, 8
  %473 = vbcast.lane.b32.xlu0 %v467, %s472
  %v474 = vpop.permute.xlu0 %473
  %v475 = vlaneseq
  %v476 = vshrl.u32 %v475, 7
  %v477 = vsub.s32 1, %v476
  %v478 = vrot.slane %v463, %v477
  %480 = vbcast.lane.b32.xlu0 %v478, 256
  %v481 = vpop.permute.xlu0 %480
  %s483 = sor.u32 256, 8
  %484 = vbcast.lane.b32.xlu0 %v478, %s483
  %v485 = vpop.permute.xlu0 %484
  %v486 = vmul.f32 %v470, %v13
  %v487 = vmul.f32 %v474, %v14
  %v488 = vmul.f32 %v481, %v13
  %v489 = vmul.f32 %v485, %v14
  %v490 = vsel %vm345, %v486, 0.0
  %v491 = vsel %vm349, %v487, 0.0
  %v492 = vadd.f32 %v490, %v491
  %v493 = vrot.slane %v492, 4
  %v494 = vadd.f32 %v492, %v493
  %v495 = vrot.slane %v494, 2
  %v496 = vadd.f32 %v494, %v495
  %v497 = vrot.slane %v496, 1
  %v498 = vadd.f32 %v496, %v497
  %v499 = vsel %vm345, %v488, 0.0
  %v500 = vsel %vm349, %v489, 0.0
  %v501 = vadd.f32 %v499, %v500
  %v502 = vrot.slane %v501, 4
  %v503 = vadd.f32 %v501, %v502
  %v504 = vrot.slane %v503, 2
  %v505 = vadd.f32 %v503, %v504
  %v506 = vrot.slane %v505, 1
  %v507 = vadd.f32 %v505, %v506
  %v510 = vlaneseq
  %v511 = vshrl.u32 %v510, 7
  %v512 = vsub.s32 %v237, %v511
  %v513 = vrot.slane %v32, %v512
  %v514 = vlaneseq
  %v515 = vshrl.u32 %v514, 7
  %v516 = vsub.s32 %v237, %v515
  %v517 = vrot.slane %v33, %v516
  %v520 = vsub.f32 %v498, %v513
  %v521 = vsub.f32 %v507, %v517
  %v522 = vmul.f32 %v520, 0.5
  %v523 = vmul.f32 %v521, 0.5
  %v524 = vlaneseq
  %v525 = vshrl.u32 %v524, 7
  %v526 = vsub.s32 0, %v525
  %v527 = vrot.slane %v522, %v526
  %529 = vbcast.lane.b32.xlu0 %v527, 256
  %v530 = vpop.permute.xlu0 %529
  %v531 = vlaneseq
  %v532 = vshrl.u32 %v531, 7
  %v533 = vsub.s32 0, %v532
  %v534 = vrot.slane %v523, %v533
  %536 = vbcast.lane.b32.xlu0 %v534, 256
  %v537 = vpop.permute.xlu0 %536
  %v541 = vunpack.c.l.s4 839922192
  %v542 = vunpack.c.0.s8 %v541
  %v543 = vlaneseq
  %v544 = vshrl.u32 %v543, 7
  %v545 = vsub.s32 %v542, %v544
  %v546 = vrot.slane %v530, %v545
  %v548 = vunpack.c.l.s4 839922192
  %v549 = vunpack.c.0.s8 %v548
  %v550 = vlaneseq
  %v551 = vshrl.u32 %v550, 7
  %v552 = vsub.s32 %v549, %v551
  %v553 = vrot.slane %v537, %v552
  %v556 = vadd.f32 %v11, %v546
  %v557 = vadd.f32 %v12, %v553
  %558 = vst [vmem:[%s2] sm:$0xff] %v556
  %559 = vst [vmem:[%s2 + $0x8] sm:$0xff] %v557
  // Predicated region
  $region10: #{prototype_alignment.1} parent=0 // pred_check
    _
  $region11: #{prototype_alignment.1} parent=0 // pred_check_branch
    %561 = sbr.rel (0) target = $region13
  $region12: #{prototype_alignment.1} parent=0 // pred_region
    _
  $region13: #{prototype_alignment.1} parent=0 // pred_fallthru
    _
  // Predicated region
  $region14: #{prototype_alignment.1} parent=0 // pred_check
    _
  $region15: #{prototype_alignment.1} parent=0 // pred_check_branch
    %563 = sbr.rel (0) target = $region17
  $region16: #{prototype_alignment.1} parent=0 // pred_region
    _
  $region17: #{prototype_alignment.1} parent=0 // pred_fallthru
    _

</llo_original>
